<compile_context>
chip_gen: v5e
topology: v5e:2x2
jax: 0.10.0
libtpu: 0.0.40
codegen_flags: <defaults>
</compile_context>

<pallas_src>
import functools
import math

import jax
import jax.numpy as jnp
from jax.experimental import pallas as pl
from jax.experimental.pallas import tpu as pltpu


# --------------------------------------------------------------------------
# helpers
# --------------------------------------------------------------------------
def _pick_tile(dim, cap, align):
    """Largest tile <= cap that is a multiple of `align` and divides `dim`;
    falls back to the full dim (allowed by the (8,128) rule)."""
    if dim <= cap:
        return dim
    t = (cap // align) * align
    while t >= align:
        if dim % t == 0:
            return t
        t -= align
    return dim


# --------------------------------------------------------------------------
# LayerNorm kernel
# --------------------------------------------------------------------------
def _layernorm_kernel(x_ref, g_ref, b_ref, o_ref, *, eps):
    x = x_ref[...].astype(jnp.float32)
    mean = jnp.mean(x, axis=-1, keepdims=True)
    var = jnp.mean((x - mean) * (x - mean), axis=-1, keepdims=True)
    inv = jax.lax.rsqrt(var + eps)
    y = (x - mean) * inv * g_ref[...] + b_ref[...]
    o_ref[...] = y.astype(o_ref.dtype)


def layer_norm(x2d, gamma, beta, eps=1e-5, row_cap=1024):
    R, E = x2d.shape
    tr = _pick_tile(R, row_cap, 8)
    g2 = gamma.reshape(1, E)
    b2 = beta.reshape(1, E)
    return pl.pallas_call(
        functools.partial(_layernorm_kernel, eps=eps),
        out_shape=jax.ShapeDtypeStruct((R, E), x2d.dtype),
        grid=(pl.cdiv(R, tr),),
        in_specs=[
            pl.BlockSpec((tr, E), lambda i: (i, 0)),
            pl.BlockSpec((1, E), lambda i: (0, 0)),
            pl.BlockSpec((1, E), lambda i: (0, 0)),
        ],
        out_specs=pl.BlockSpec((tr, E), lambda i: (i, 0)),
        compiler_params=pltpu.CompilerParams(dimension_semantics=("parallel",)),
    )(x2d, g2, b2)


# --------------------------------------------------------------------------
# Linear (matmul + bias, optional relu, optional fused residual add)
# --------------------------------------------------------------------------
def _linear_kernel(x_ref, w_ref, b_ref, *rest, activation, add_residual):
    if add_residual:
        res_ref, o_ref, acc_ref = rest
    else:
        o_ref, acc_ref = rest
        res_ref = None

    k = pl.program_id(2)

    @pl.when(k == 0)
    def _():
        acc_ref[...] = jnp.zeros_like(acc_ref)

    acc_ref[...] += jnp.dot(
        x_ref[...], w_ref[...], preferred_element_type=jnp.float32
    )

    @pl.when(k == pl.num_programs(2) - 1)
    def _():
        y = acc_ref[...] + b_ref[...]
        if activation == "relu":
            y = jnp.maximum(y, 0.0)
        if add_residual:
            y = y + res_ref[...]
        o_ref[...] = y.astype(o_ref.dtype)


def linear(x2d, w, b, residual=None, activation=None,
           tm_cap=256, tn_cap=512, tk_cap=512):
    """y = act(x @ w + b) [+ residual].  w is (in, out), b is (out,)."""
    M, K = x2d.shape
    K2, N = w.shape
    assert K == K2
    tm = _pick_tile(M, tm_cap, 8)
    tn = _pick_tile(N, tn_cap, 128)
    tk = _pick_tile(K, tk_cap, 128)
    grid = (pl.cdiv(M, tm), pl.cdiv(N, tn), pl.cdiv(K, tk))

    b2 = b.reshape(1, N)
    inputs = [x2d, w, b2]
    in_specs = [
        pl.BlockSpec((tm, tk), lambda i, j, k: (i, k)),
        pl.BlockSpec((tk, tn), lambda i, j, k: (k, j)),
        pl.BlockSpec((1, tn), lambda i, j, k: (0, j)),
    ]
    if residual is not None:
        inputs.append(residual)
        in_specs.append(pl.BlockSpec((tm, tn), lambda i, j, k: (i, j)))

    kernel = functools.partial(
        _linear_kernel, activation=activation, add_residual=residual is not None
    )
    return pl.pallas_call(
        kernel,
        out_shape=jax.ShapeDtypeStruct((M, N), x2d.dtype),
        grid=grid,
        in_specs=in_specs,
        out_specs=pl.BlockSpec((tm, tn), lambda i, j, k: (i, j)),
        scratch_shapes=[pltpu.VMEM((tm, tn), jnp.float32)],
        compiler_params=pltpu.CompilerParams(
            dimension_semantics=("parallel", "parallel", "arbitrary")
        ),
    )(*inputs)


# --------------------------------------------------------------------------
# Scaled-dot-product attention kernel (one (batch*head) per grid step)
# --------------------------------------------------------------------------
def _attn_kernel(q_ref, k_ref, v_ref, o_ref, *, scale, causal):
    q = q_ref[...].astype(jnp.float32) * scale        # (1, T, Dh)
    k = k_ref[...].astype(jnp.float32)                 # (1, S, Dh)
    v = v_ref[...].astype(jnp.float32)                 # (1, S, Dh)

    s = jnp.einsum("btd,bsd->bts", q, k, preferred_element_type=jnp.float32)

    if causal:
        T, S = s.shape[1], s.shape[2]
        row = jax.lax.broadcasted_iota(jnp.int32, (1, T, S), 1)
        col = jax.lax.broadcasted_iota(jnp.int32, (1, T, S), 2)
        offset = 1 + abs(S - T)          # matches buffered_future_mask's triu offset
        s = jnp.where((col - row) >= offset, -jnp.inf, s)

    m = jnp.max(s, axis=-1, keepdims=True)
    p = jnp.exp(s - m)
    l = jnp.sum(p, axis=-1, keepdims=True)
    p = p / l
    out = jnp.einsum("bts,bsd->btd", p, v, preferred_element_type=jnp.float32)
    o_ref[...] = out.astype(o_ref.dtype)


def attention(qh, kh, vh, scale, causal=False):
    """qh/kh/vh: (B*H, T, Dh).  Returns (B*H, T, Dh)."""
    BH, T, Dh = qh.shape
    S = kh.shape[1]
    # TODO(synk): for long sequences, tile K/V over S with an online-softmax
    # (flash) accumulator instead of holding the full row per head.
    return pl.pallas_call(
        functools.partial(_attn_kernel, scale=scale, causal=causal),
        out_shape=jax.ShapeDtypeStruct((BH, T, Dh), qh.dtype),
        grid=(BH,),
        in_specs=[
            pl.BlockSpec((1, T, Dh), lambda h: (h, 0, 0)),
            pl.BlockSpec((1, S, Dh), lambda h: (h, 0, 0)),
            pl.BlockSpec((1, S, Dh), lambda h: (h, 0, 0)),
        ],
        out_specs=pl.BlockSpec((1, T, Dh), lambda h: (h, 0, 0)),
        compiler_params=pltpu.CompilerParams(dimension_semantics=("parallel",)),
    )(qh, kh, vh)


# --------------------------------------------------------------------------
# Full TransformerEncoderLayer forward (inference / eval mode)
# --------------------------------------------------------------------------
def transformer_encoder_layer(x, params, num_heads, causal=False):
    """x: (seq_len, batch, embed_dim) f32.  Returns the same shape."""
    T, B, E = x.shape
    H = num_heads
    Dh = E // H
    assert Dh * H == E
    scale = Dh ** (-0.5)
    R = T * B

    x2d = x.reshape(R, E)

    # ---- self-attention block (pre-LN) ----
    residual = x2d
    h = layer_norm(x2d, params["ln0_g"], params["ln0_b"])

    qkv = linear(h, params["in_proj_w_t"], params["in_proj_b"])     # (R, 3E)
    q, k, v = qkv[:, :E], qkv[:, E:2 * E], qkv[:, 2 * E:]

    def to_heads(z):                      # (R, E) -> (B*H, T, Dh)
        return z.reshape(T, B * H, Dh).transpose(1, 0, 2)

    attn = attention(to_heads(q), to_heads(k), to_heads(v), scale, causal=causal)
    attn2d = attn.transpose(1, 0, 2).reshape(R, E)                   # back to rows

    # out projection + residual add (fused); dropout is identity in eval mode.
    # TODO(synk): training-mode dropout would need pltpu.prng_* inside the kernels.
    x2d = linear(attn2d, params["out_proj_w_t"], params["out_proj_b"],
                 residual=residual)

    # ---- feed-forward block (pre-LN) ----
    residual = x2d
    h = layer_norm(x2d, params["ln1_g"], params["ln1_b"])
    h = linear(h, params["fc1_w_t"], params["fc1_b"], activation="relu")
    x2d = linear(h, params["fc2_w_t"], params["fc2_b"], residual=residual)

    return x2d.reshape(T, B, E)


# --------------------------------------------------------------------------
# pure-JAX reference (mirrors the PyTorch module in eval mode)
# --------------------------------------------------------------------------
def _reference_forward(x, p, num_heads, causal=False, eps=1e-5):
    T, B, E = x.shape
    H = num_heads
    Dh = E // H
    scale = Dh ** (-0.5)

    def ln(z, g, b):
        mu = jnp.mean(z, axis=-1, keepdims=True)
        var = jnp.mean((z - mu) ** 2, axis=-1, keepdims=True)
        return (z - mu) / jnp.sqrt(var + eps) * g + b

    residual = x
    h = ln(x, p["ln0_g"], p["ln0_b"])
    qkv = h @ p["in_proj_w_t"] + p["in_proj_b"]
    q, k, v = qkv[..., :E], qkv[..., E:2 * E], qkv[..., 2 * E:]

    def heads(z):
        return z.reshape(T, B * H, Dh).transpose(1, 0, 2)

    qh, kh, vh = heads(q) * scale, heads(k), heads(v)
    s = jnp.einsum("btd,bsd->bts", qh, kh)
    if causal:
        row = jnp.arange(T)[:, None]
        col = jnp.arange(s.shape[-1])[None, :]
        s = jnp.where((col - row) >= 1 + abs(s.shape[-1] - T), -jnp.inf, s)
    pw = jax.nn.softmax(s, axis=-1)
    a = jnp.einsum("bts,bsd->btd", pw, vh)
    a = a.transpose(1, 0, 2).reshape(T, B, E)
    a = a @ p["out_proj_w_t"] + p["out_proj_b"]
    x1 = residual + a

    residual = x1
    h = ln(x1, p["ln1_g"], p["ln1_b"])
    h = jax.nn.relu(h @ p["fc1_w_t"] + p["fc1_b"])
    h = h @ p["fc2_w_t"] + p["fc2_b"]
    return residual + h


# --------------------------------------------------------------------------
if __name__ == "__main__":
    key = jax.random.PRNGKey(0)
    T, B, E, H = 8, 2, 32, 4     # seq_len, batch, embed_dim, num_heads

    ks = jax.random.split(key, 12)
    scale_init = 1.0 / math.sqrt(E)
    params = {
        "in_proj_w_t": jax.random.normal(ks[0], (E, 3 * E), jnp.float32) * scale_init,
        "in_proj_b":   jax.random.normal(ks[1], (3 * E,), jnp.float32) * 0.01,
        "out_proj_w_t": jax.random.normal(ks[2], (E, E), jnp.float32) * scale_init,
        "out_proj_b":   jax.random.normal(ks[3], (E,), jnp.float32) * 0.01,
        "fc1_w_t": jax.random.normal(ks[4], (E, 4 * E), jnp.float32) * scale_init,
        "fc1_b":   jax.random.normal(ks[5], (4 * E,), jnp.float32) * 0.01,
        "fc2_w_t": jax.random.normal(ks[6], (4 * E, E), jnp.float32) * (0.5 * scale_init),
        "fc2_b":   jax.random.normal(ks[7], (E,), jnp.float32) * 0.01,
        "ln0_g": 1.0 + 0.1 * jax.random.normal(ks[8], (E,), jnp.float32),
        "ln0_b": 0.1 * jax.random.normal(ks[9], (E,), jnp.float32),
        "ln1_g": 1.0 + 0.1 * jax.random.normal(ks[10], (E,), jnp.float32),
        "ln1_b": 0.1 * jax.random.normal(ks[11], (E,), jnp.float32),
    }
    x = jax.random.normal(jax.random.PRNGKey(1), (T, B, E), jnp.float32)

    out = transformer_encoder_layer(x, params, H, causal=False)
    out = jax.block_until_ready(out)

    ref = _reference_forward(x, params, H, causal=False)
    assert out.shape == (T, B, E)
    assert out.dtype == jnp.float32
    err = float(jnp.max(jnp.abs(out - ref)))
    assert jnp.allclose(out, ref, atol=1e-4, rtol=1e-4), f"max abs err {err}"

    print("KERNEL_OK")
</pallas_src>

<mosaic_0001>
module attributes {stable_mosaic.version = 11 : i64} {
  func.func @_layernorm_kernel(%arg0: i32, %arg1: memref<16x32xf32, #tpu.memory_space<vmem>>, %arg2: memref<1x32xf32, #tpu.memory_space<vmem>>, %arg3: memref<1x32xf32, #tpu.memory_space<vmem>>, %arg4: memref<16x32xf32, #tpu.memory_space<vmem>>) attributes {dimension_semantics = [#tpu.dimension_semantics<parallel>], iteration_bounds = array<i64: 1>, scalar_prefetch = 0 : i64, scratch_operands = 0 : i64, tpu.core_type = #tpu.core_type<tc>, window_params = [{transform_indices = @transform_0, window_bounds = array<i64: 16, 32>}, {pipeline_mode = #tpu.pipeline_mode<synchronous>, transform_indices = @transform_1, window_bounds = array<i64: 1, 32>}, {pipeline_mode = #tpu.pipeline_mode<synchronous>, transform_indices = @transform_2, window_bounds = array<i64: 1, 32>}, {transform_indices = @transform_3, window_bounds = array<i64: 16, 32>}]} {
    %c0 = arith.constant 0 : index
    %c0_0 = arith.constant 0 : index
    %0 = vector.load %arg1[%c0, %c0_0] : memref<16x32xf32, #tpu.memory_space<vmem>>, vector<16x32xf32>
    %cst = arith.constant dense<0.000000e+00> : vector<16xf32>
    %1 = vector.multi_reduction <add>, %0, %cst [1] : vector<16x32xf32> to vector<16xf32>
    %2 = vector.shape_cast %1 : vector<16xf32> to vector<16x1xf32>
    %cst_1 = arith.constant 3.200000e+01 : f32
    %3 = vector.broadcast %cst_1 : f32 to vector<16x1xf32>
    %4 = arith.divf %2, %3 : vector<16x1xf32>
    %5 = vector.broadcast %4 : vector<16x1xf32> to vector<16x32xf32>
    %6 = arith.subf %0, %5 : vector<16x32xf32>
    %7 = vector.broadcast %4 : vector<16x1xf32> to vector<16x32xf32>
    %8 = arith.subf %0, %7 : vector<16x32xf32>
    %9 = arith.mulf %6, %8 : vector<16x32xf32>
    %cst_2 = arith.constant dense<0.000000e+00> : vector<16xf32>
    %10 = vector.multi_reduction <add>, %9, %cst_2 [1] : vector<16x32xf32> to vector<16xf32>
    %11 = vector.shape_cast %10 : vector<16xf32> to vector<16x1xf32>
    %cst_3 = arith.constant 3.200000e+01 : f32
    %12 = vector.broadcast %cst_3 : f32 to vector<16x1xf32>
    %13 = arith.divf %11, %12 : vector<16x1xf32>
    %cst_4 = arith.constant 9.99999974E-6 : f32
    %14 = vector.broadcast %cst_4 : f32 to vector<16x1xf32>
    %15 = arith.addf %13, %14 : vector<16x1xf32>
    %16 = math.rsqrt %15 : vector<16x1xf32>
    %17 = vector.broadcast %4 : vector<16x1xf32> to vector<16x32xf32>
    %18 = arith.subf %0, %17 : vector<16x32xf32>
    %19 = vector.broadcast %16 : vector<16x1xf32> to vector<16x32xf32>
    %20 = arith.mulf %18, %19 : vector<16x32xf32>
    %c0_5 = arith.constant 0 : index
    %c0_6 = arith.constant 0 : index
    %21 = vector.load %arg2[%c0_5, %c0_6] : memref<1x32xf32, #tpu.memory_space<vmem>>, vector<1x32xf32>
    %22 = vector.broadcast %21 : vector<1x32xf32> to vector<16x32xf32>
    %23 = arith.mulf %20, %22 : vector<16x32xf32>
    %c0_7 = arith.constant 0 : index
    %c0_8 = arith.constant 0 : index
    %24 = vector.load %arg3[%c0_7, %c0_8] : memref<1x32xf32, #tpu.memory_space<vmem>>, vector<1x32xf32>
    %25 = vector.broadcast %24 : vector<1x32xf32> to vector<16x32xf32>
    %26 = arith.addf %23, %25 : vector<16x32xf32>
    %c0_9 = arith.constant 0 : index
    %c0_10 = arith.constant 0 : index
    %27 = vector.load %arg4[%c0_9, %c0_10] : memref<16x32xf32, #tpu.memory_space<vmem>>, vector<16x32xf32>
    tpu.vector_store %arg4[%c0_9, %c0_10], %26 {strides = array<i32>} : memref<16x32xf32, #tpu.memory_space<vmem>>, vector<16x32xf32>,
    return
  }
  func.func @transform_0(%arg0: i32) -> (i32, i32) {
    %c0_i32 = arith.constant 0 : i32
    %c0_i32_0 = arith.constant 0 : i32
    return %arg0, %c0_i32 : i32, i32
  }
  func.func @transform_1(%arg0: i32) -> (i32, i32) {
    %c0_i32 = arith.constant 0 : i32
    %c0_i32_0 = arith.constant 0 : i32
    %c0_i32_1 = arith.constant 0 : i32
    return %c0_i32, %c0_i32_0 : i32, i32
  }
  func.func @transform_2(%arg0: i32) -> (i32, i32) {
    %c0_i32 = arith.constant 0 : i32
    %c0_i32_0 = arith.constant 0 : i32
    %c0_i32_1 = arith.constant 0 : i32
    return %c0_i32, %c0_i32_0 : i32, i32
  }
  func.func @transform_3(%arg0: i32) -> (i32, i32) {
    %c0_i32 = arith.constant 0 : i32
    %c0_i32_0 = arith.constant 0 : i32
    return %arg0, %c0_i32 : i32, i32
  }
}

</mosaic_0001>

<llo_original>
// kernel: tpu_custom_call.1
$region0: #{tpu_custom_call.1}
  #allocation0 [shape = 'u32[]', space=smem, size = 0x4, offset = 0x4, fixed_abs, tag = 'smem constant byte address 0x4 - core index']
  #allocation1 [shape = 'u32[72,128]{1,0:T(1,128)}', space=vmem, size = 0x9000, scoped, tag = 'internal scratch']
  %s0 = inlined_call_operand.hbm [shape: f32[16,32], index: 0, kind: input, shape index: {}]
  %s1 = inlined_call_operand.hbm [shape: f32[1,32], index: 1, kind: input, shape index: {}]
  %s2 = inlined_call_operand.vmem [shape: f32[1,32], index: 2, kind: input, shape index: {}]
  %s3 = inlined_call_operand.hbm [shape: f32[16,32], index: 3, kind: output, shape index: {}]
  %s4 = sld [smem:[#allocation0]]
  $region30: #{tpu_custom_call.1} parent=0
    _
  %s6 = ssub.s32 1, %s4
  %s7 = scalar_select 0, %s6, %s4
  $region1: #{tpu_custom_call.1} parent=0
    #allocation2 [shape = 'u8[8192]{0}', space=vmem, size = 0x2000, scoped, tag = 'input window, operand 0, single buffered']
    #allocation3 [shape = 's32[1]{0}', space=sflag, size = 0x4, scoped, tag = 'scoped memory for tpu_custom_call.1']
    #allocation4 [shape = 's32[1]{0}', space=sflag, size = 0x4, scoped, tag = 'scoped memory for tpu_custom_call.1']
    #allocation5 [shape = 'u8[512]{0}', space=vmem, size = 0x400, scoped, tag = 'input window, operand 1, single buffered']
    #allocation6 [shape = 's32[1]{0}', space=sflag, size = 0x4, scoped, tag = 'scoped memory for tpu_custom_call.1']
    #allocation7 [shape = 'u8[8192]{0}', space=vmem, size = 0x2000, scoped, tag = 'output window, operand 0, single buffered']
    %8 = vsyncpa [#allocation3], 0
    %9 = vsyncpa [#allocation6], 0
    %10 = vsyncpa [#allocation4], 0
    // Predicated region
    $region2: #{tpu_custom_call.1} parent=1 // pred_check
      _
    $region3: #{tpu_custom_call.1} parent=1 // pred_check_branch
      %12 = sbr.rel (0) target = $region5
    $region4: #{tpu_custom_call.1} parent=1 // pred_region
      %14 = vsyncadd [#allocation3], 0
      %s15 = sshll.u32 %s0, 4
      %s16 = int_to_ptr.hbm [resolvable:$true] %s15
      %s17 = sshll.u32 [#allocation2], 4
      %s18 = int_to_ptr.vmem [resolvable:$true] %s17
      %23 = dma.hbm_to_vmem [thread:$0]  %s16, 256, %s18, [#allocation3], 128, 128, 8
    $region5: #{tpu_custom_call.1} parent=1 // pred_fallthru
      _
    // Predicated region
    $region6: #{tpu_custom_call.1} parent=1 // pred_check
      _
    $region7: #{tpu_custom_call.1} parent=1 // pred_check_branch
      %25 = sbr.rel (0) target = $region9
    $region8: #{tpu_custom_call.1} parent=1 // pred_region
      %27 = vsyncadd [#allocation6], 0
      %s29 = sshll.u32 %s1, 4
      %s30 = int_to_ptr.hbm [resolvable:$true] %s29
      %s31 = sshll.u32 [#allocation5], 4
      %s32 = int_to_ptr.vmem [resolvable:$true] %s31
      %34 = dma.hbm_to_vmem [thread:$0]  %s30, 16, %s32, [#allocation6]
    $region9: #{tpu_custom_call.1} parent=1 // pred_fallthru
      _
    // Predicated region
    $region10: #{tpu_custom_call.1} parent=1 // pred_check
      _
    $region11: #{tpu_custom_call.1} parent=1 // pred_check_branch
      %36 = sbr.rel (0) target = $region13
    $region12: #{tpu_custom_call.1} parent=1 // pred_region
      _
    $region13: #{tpu_custom_call.1} parent=1 // pred_fallthru
      _
    // Predicated region
    $region14: #{tpu_custom_call.1} parent=1 // pred_check
      _
    $region15: #{tpu_custom_call.1} parent=1 // pred_check_branch
      %38 = sbr.rel (0) target = $region17
    $region16: #{tpu_custom_call.1} parent=1 // pred_region
      %40 = dma.done [#allocation3], 256
    $region17: #{tpu_custom_call.1} parent=1 // pred_fallthru
      _
    // Predicated region
    $region18: #{tpu_custom_call.1} parent=1 // pred_check
      _
    $region19: #{tpu_custom_call.1} parent=1 // pred_check_branch
      %42 = sbr.rel (0) target = $region21
    $region20: #{tpu_custom_call.1} parent=1 // pred_region
      %44 = dma.done [#allocation6], 16
    $region21: #{tpu_custom_call.1} parent=1 // pred_fallthru
      _
    %v45 = vld [vmem:[#allocation2] sm:$0xff]
    %v46 = vld [vmem:[#allocation2 + $0x8] sm:$0xff]
    %vm47 = vcmask 261120
    %v48 = vsel %vm47, %v45, 0.0
    %49 = vadd.xlane.f32.xlu0 %v48
    %v50 = vpop.xlane.xlu0 %49
    %v51 = vsel %vm47, %v46, 0.0
    %52 = vadd.xlane.f32.xlu0 %v51
    %v53 = vpop.xlane.xlu0 %52
    %v54 = vrcp.pop 32.0
    %v55 = vmul.f32 32.0, %v54
    %v56 = vsub.f32 1.0, %v55
    %v57 = vmul.f32 %v54, %v56
    %v58 = vadd.f32 %v54, %v57
    %vm59 = vweird.f32 %v54
    %v60 = vsel %vm59, %v54, %v58
    %v61 = vmul.f32 %v50, %v60
    %v62 = vmul.f32 %v53, %v60
    %v63 = vsub.f32 %v45, %v61
    %v64 = vsub.f32 %v46, %v62
    %v65 = vmul.f32 %v63, %v63
    %v66 = vmul.f32 %v64, %v64
    %v67 = vsel %vm47, %v65, 0.0
    %68 = vadd.xlane.f32.xlu0 %v67
    %v69 = vpop.xlane.xlu0 %68
    %v70 = vsel %vm47, %v66, 0.0
    %71 = vadd.xlane.f32.xlu0 %v70
    %v72 = vpop.xlane.xlu0 %71
    %v73 = vmul.f32 %v69, %v60
    %v74 = vmul.f32 %v72, %v60
    %v75 = vadd.f32 %v73, 1e-05
    %v76 = vadd.f32 %v74, 1e-05
    %v77 = vrsqrt.pop %v75
    %v78 = vmul.f32 %v77, %v75
    %v79 = vmul.f32 %v78, %v77
    %v80 = vmul.f32 0.5, %v79
    %v81 = vsub.f32 1.5, %v80
    %v82 = vmul.f32 %v77, %v81
    %vm83 = vweird.f32 %v75
    %vm84 = vweird.f32 %v77
    %vm85 = vmor %vm83, %vm84
    %v86 = vsel %vm85, %v77, %v82
    %v87 = vrsqrt.pop %v76
    %v88 = vmul.f32 %v87, %v76
    %v89 = vmul.f32 %v88, %v87
    %v90 = vmul.f32 0.5, %v89
    %v91 = vsub.f32 1.5, %v90
    %v92 = vmul.f32 %v87, %v91
    %vm93 = vweird.f32 %v76
    %vm94 = vweird.f32 %v87
    %vm95 = vmor %vm93, %vm94
    %v96 = vsel %vm95, %v87, %v92
    %v97 = vmul.f32 %v63, %v86
    %v98 = vmul.f32 %v64, %v96
    %v99 = vld [vmem:[#allocation5] sm:$0x1]
    %v101 = vperm.slane %v99, 0
    %v103 = vmul.f32 %v97, %v101
    %v104 = vmul.f32 %v98, %v101
    %v105 = vld [vmem:[%s2] sm:$0x1]
    %v107 = vperm.slane %v105, 0
    %v109 = vadd.f32 %v103, %v107
    %v110 = vadd.f32 %v104, %v107
    %111 = vst.msk [vmem:[#allocation7] sm:$0xff] %vm47, %v109
    %112 = vst.msk [vmem:[#allocation7 + $0x8] sm:$0xff] %vm47, %v110
    // Predicated region
    $region22: #{tpu_custom_call.1} parent=1 // pred_check
      _
    $region23: #{tpu_custom_call.1} parent=1 // pred_check_branch
      %114 = sbr.rel (0) target = $region25
    $region24: #{tpu_custom_call.1} parent=1 // pred_region
      %116 = vsyncadd [#allocation4], 0
      %s117 = sshll.u32 [#allocation7], 4
      %s118 = int_to_ptr.vmem [resolvable:$true] %s117
      %s119 = sshll.u32 %s3, 4
      %s120 = int_to_ptr.hbm [resolvable:$true] %s119
      %125 = dma.vmem_to_hbm [thread:$0]  %s118, 256, %s120, [#allocation4], 128, 128, 8
    $region25: #{tpu_custom_call.1} parent=1 // pred_fallthru
      _
    // Predicated region
    $region26: #{tpu_custom_call.1} parent=1 // pred_check
      _
    $region27: #{tpu_custom_call.1} parent=1 // pred_check_branch
      %127 = sbr.rel (0) target = $region29
    $region28: #{tpu_custom_call.1} parent=1 // pred_region
      %129 = dma.done [#allocation4], 256
    $region29: #{tpu_custom_call.1} parent=1 // pred_fallthru
      _
    %130 = vsyncpa [#allocation3], 1
    %131 = vsyncpa [#allocation6], 1
    %132 = vsyncpa [#allocation4], 1

</llo_original>
